<compile_context>
chip_gen: v6e
topology: v6e:2x2x1
jax: 0.10.0
libtpu: 0.0.40
codegen_flags: <defaults>
</compile_context>

<pallas_src>
import jax
import jax.numpy as jnp
from jax import lax
from jax.experimental import pallas as pl
from jax.experimental.pallas import tpu as pltpu


def _pick_row_block(B, H, W, c_in, n_feat, img_itemsize, feat_itemsize,
                    budget_bytes=20 * 1024 * 1024):
    """Largest strip height TH (divisor of H) whose per-step VMEM fits the budget."""
    def footprint(th):
        ln1 = (th + 2) * W
        p_scr = max(9 * c_in, 9 * n_feat) * ln1 * 2          # shared bf16 im2col
        y1 = n_feat * ln1 * 4                                  # f32 y1 strip
        io = 2 * (c_in * (th + 4) * W * img_itemsize          # double-buffered blocks
                  + 2 * n_feat * th * W * feat_itemsize)
        return p_scr + y1 + io

    divs = [d for d in range(1, H + 1) if H % d == 0]
    # out/feat blocks have last dim TH*W -> must be 128-divisible unless TH == H.
    valid = [d for d in divs if d == H or (d * W) % 128 == 0]
    fitting = [d for d in valid if footprint(d) <= budget_bytes]
    if not fitting:
        return min(valid)
    th = max(fitting)
    if B == 1 and th == H:
        # keep a parallel spatial axis so both v7x TensorCores get work at B=1
        smaller = [d for d in fitting if d < H]
        if smaller:
            th = max(smaller)
    return th


def _make_rfm_kernel(H, W, TH, c_in, n_feat):
    LN1 = (TH + 2) * W      # y1 strip with 1-row halo each side (flattened lanes)
    LN2 = TH * W            # output strip (flattened lanes)
    K1 = 9 * c_in           # contiguously packed conv1 K
    K2 = 9 * n_feat         # contiguously packed conv2 K

    def kernel(alpha_ref, img_ref, feat_ref, w1_ref, w2_ref, out_ref,
               p_ref, y1_ref):
        # alpha_ref: (1,) SMEM                  img_ref:  (1, 1, c_in, (TH+4)*W)
        # feat_ref:  (1, n_feat, TH*W)          w1_ref:   (n_feat, 9*c_in)   bf16
        # out_ref:   (1, n_feat, TH*W)          w2_ref:   (n_feat, 9*n_feat) bf16
        # p_ref:     (max(K1,K2), (TH+2)*W) bf16 shared im2col scratch
        # y1_ref:    (n_feat, (TH+2)*W)     f32  conv1 output (with row halos)
        s = pl.program_id(1)
        n_s = pl.num_programs(1)

        # Column-replicate masks (global: W is never tiled). Computed once, reused.
        col = lax.broadcasted_iota(jnp.int32, (1, LN1), 1) % W
        m_l1 = col == 0
        m_r1 = col == (W - 1)
        m_l2 = m_l1[:, :LN2]
        m_r2 = m_r1[:, :LN2]

        # ---------------- conv1 (replicate pad) + PReLU ----------------
        # Vertical taps are static lane slices of the 2-row-padded image strip;
        # horizontal replicate is done with XLU lane rolls + boundary selects.
        taps1 = []
        for ky in range(3):
            base = img_ref[0, 0, :, ky * W:ky * W + LN1].astype(jnp.float32)
            lf = jnp.where(m_l1, base, pltpu.roll(base, 1, axis=1))
            rt = jnp.where(m_r1, base, pltpu.roll(base, LN1 - 1, axis=1))
            taps1 += [lf, base, rt]
        p_ref[0:K1, :] = jnp.concatenate(taps1, axis=0).astype(p_ref.dtype)

        y1 = jnp.dot(w1_ref[...], p_ref[0:K1, :],
                     preferred_element_type=jnp.float32)        # (n_feat, LN1)
        alpha = alpha_ref[0]
        y1_ref[...] = jnp.where(y1 >= 0.0, y1, alpha * y1)       # PReLU (f32)

        # Global top/bottom replicate for conv2: the first/last halo row of y1
        # is only valid at interior strip edges; at the image border it must be
        # a copy of the adjacent real row.
        @pl.when(s == 0)
        def _():
            y1_ref[:, 0:W] = y1_ref[:, W:2 * W]

        @pl.when(s == n_s - 1)
        def _():
            y1_ref[:, LN1 - W:LN1] = y1_ref[:, LN1 - 2 * W:LN1 - W]

        # ---------------- conv2 (replicate pad) + sigmoid + gate ----------------
        for ky in range(3):
            base = y1_ref[:, ky * W:ky * W + LN2]                # (n_feat, LN2) f32
            lf = jnp.where(m_l2, base, pltpu.roll(base, 1, axis=1))
            rt = jnp.where(m_r2, base, pltpu.roll(base, LN2 - 1, axis=1))
            for kx, tap in enumerate((lf, base, rt)):
                t = 3 * ky + kx
                p_ref[t * n_feat:(t + 1) * n_feat, 0:LN2] = tap.astype(p_ref.dtype)

        y2 = jnp.dot(w2_ref[...], p_ref[0:K2, 0:LN2],
                     preferred_element_type=jnp.float32)         # (n_feat, LN2)

        # sigmoid via EUP exp + approximate reciprocal (frees the VALU divide)
        e = jnp.exp(jnp.minimum(-y2, 80.0))
        gate = pl.reciprocal(1.0 + e, approx=True)

        f = feat_ref[0].astype(jnp.float32)                      # (n_feat, LN2)
        out_ref[0] = (f * (1.0 + gate)).astype(out_ref.dtype)    # f + f*gate

    return kernel, K1, K2, LN1, LN2


def rfm_forward(in_feat_nchw, in_img_nchw, w1_hwio, prelu_alpha, w2_hwio,
                *, row_block=None):
    """RFM forward. in_feat: (B, n_feat, H, W), in_img: (B, c_in, H, W), NCHW out."""
    B, n_feat, H, W = in_feat_nchw.shape
    c_in = in_img_nchw.shape[1]
    HW = H * W

    if row_block is None:
        TH = _pick_row_block(B, H, W, c_in, n_feat,
                             jnp.dtype(in_img_nchw.dtype).itemsize,
                             jnp.dtype(in_feat_nchw.dtype).itemsize)
    else:
        TH = int(row_block)
        assert H % TH == 0, "row_block must divide H"
        assert TH == H or (TH * W) % 128 == 0, "TH*W must be a multiple of 128"
    n_strips = H // TH
    LN_slab = (TH + 4) * W

    kernel, K1, K2, LN1, LN2 = _make_rfm_kernel(H, W, TH, c_in, n_feat)

    # Replicate-pad the (tiny, c_in-channel) image by 2 rows each side and carve
    # overlapping row strips wrapper-side -> no manual DMA / overlapping
    # BlockSpecs needed in the kernel.  All other reshapes are metadata-only.
    top = in_img_nchw[:, :, :1, :]
    bot = in_img_nchw[:, :, -1:, :]
    img_p = jnp.concatenate([top, top, in_img_nchw, bot, bot], axis=2)
    img_p = img_p.reshape(B, c_in, (H + 4) * W)
    img_strips = jnp.stack(
        [img_p[:, :, s * TH * W:s * TH * W + LN_slab] for s in range(n_strips)],
        axis=1)                                           # (B, n_strips, c_in, LN_slab)

    feat = in_feat_nchw.reshape(B, n_feat, HW)            # native dtype, lane-dense

    # HWIO -> (Cout, K) with K ordered (ky, kx, cin), contiguous (no pad rows).
    w1m = jnp.transpose(w1_hwio, (3, 0, 1, 2)).reshape(n_feat, K1).astype(jnp.bfloat16)
    w2m = jnp.transpose(w2_hwio, (3, 0, 1, 2)).reshape(n_feat, K2).astype(jnp.bfloat16)
    alpha = jnp.asarray(prelu_alpha, jnp.float32).reshape(1)

    # TODO(synk): when H*W is tiny and B is large, pack several images per grid
    # step (N = NB*H*W) to amortize the per-step overhead and MXU issue/drain.
    out = pl.pallas_call(
        kernel,
        out_shape=jax.ShapeDtypeStruct((B, n_feat, HW), in_feat_nchw.dtype),
        grid=(B, n_strips),
        in_specs=[
            pl.BlockSpec(memory_space=pltpu.SMEM),                          # alpha
            pl.BlockSpec((1, 1, c_in, LN_slab), lambda b, s: (b, s, 0, 0)),  # image strip (+halo)
            pl.BlockSpec((1, n_feat, LN2), lambda b, s: (b, 0, s)),          # in_feat strip
            pl.BlockSpec((n_feat, K1), lambda b, s: (0, 0)),                 # conv1 weights
            pl.BlockSpec((n_feat, K2), lambda b, s: (0, 0)),                 # conv2 weights
        ],
        out_specs=pl.BlockSpec((1, n_feat, LN2), lambda b, s: (b, 0, s)),
        scratch_shapes=[
            pltpu.VMEM((max(K1, K2), LN1), jnp.bfloat16),   # shared im2col (bf16)
            pltpu.VMEM((n_feat, LN1), jnp.float32),         # y1 strip (+halo rows)
        ],
        compiler_params=pltpu.CompilerParams(
            dimension_semantics=("parallel", "parallel"),
            vmem_limit_bytes=48 * 1024 * 1024),
    )(alpha, img_strips, feat, w1m, w2m)

    return out.reshape(B, n_feat, H, W)


def rfm_reference(in_feat_nchw, in_img_nchw, w1_hwio, prelu_alpha, w2_hwio):
    """Pure-JAX reference, mirroring the kernel's bf16 rounding of MXU operands."""
    f32 = jnp.float32
    bf = lambda a: a.astype(jnp.bfloat16).astype(f32)
    a = jnp.asarray(prelu_alpha, f32).reshape(1)

    x = jnp.transpose(bf(in_img_nchw.astype(f32)), (0, 2, 3, 1))
    f = jnp.transpose(in_feat_nchw.astype(f32), (0, 2, 3, 1))
    w1r = bf(w1_hwio.astype(f32))
    w2r = bf(w2_hwio.astype(f32))

    xp = jnp.pad(x, ((0, 0), (1, 1), (1, 1), (0, 0)), mode='edge')
    y = lax.conv_general_dilated(xp, w1r, (1, 1), 'VALID',
                                 dimension_numbers=('NHWC', 'HWIO', 'NHWC'))
    y = jnp.where(y >= 0.0, y, a * y)
    y = bf(y)
    yp = jnp.pad(y, ((0, 0), (1, 1), (1, 1), (0, 0)), mode='edge')
    y2 = lax.conv_general_dilated(yp, w2r, (1, 1), 'VALID',
                                  dimension_numbers=('NHWC', 'HWIO', 'NHWC'))
    out = f * (1.0 + jax.nn.sigmoid(y2))
    return jnp.transpose(out, (0, 3, 1, 2))


if __name__ == "__main__":
    key = jax.random.PRNGKey(0)
    k_feat, k_img, k_w1, k_w2 = jax.random.split(key, 4)

    B, n_feat, in_c, H, W = 2, 8, 3, 16, 16

    in_feat = jax.random.normal(k_feat, (B, n_feat, H, W), dtype=jnp.float32)
    in_img = jax.random.normal(k_img, (B, in_c, H, W), dtype=jnp.float32)

    # Weights in HWIO layout (PyTorch OIHW w_oihw <-> w_hwio[ky,kx,i,o] = w_oihw[o,i,ky,kx]).
    w1 = 0.1 * jax.random.normal(k_w1, (3, 3, in_c, n_feat), dtype=jnp.float32)
    w2 = 0.1 * jax.random.normal(k_w2, (3, 3, n_feat, n_feat), dtype=jnp.float32)
    prelu_alpha = jnp.full((1,), 0.25, dtype=jnp.float32)  # nn.PReLU() default

    ref = jax.block_until_ready(rfm_reference(in_feat, in_img, w1, prelu_alpha, w2))

    # Default config (single strip here) and a forced 2-strip config to exercise
    # the halo / global-boundary fix-up path.
    out_a = jax.block_until_ready(rfm_forward(in_feat, in_img, w1, prelu_alpha, w2))
    out_b = jax.block_until_ready(
        rfm_forward(in_feat, in_img, w1, prelu_alpha, w2, row_block=8))

    for out in (out_a, out_b):
        assert out.shape == (B, n_feat, H, W)
        assert jnp.allclose(out, ref, atol=1e-2, rtol=1e-2), \
            float(jnp.max(jnp.abs(out - ref)))

    print("KERNEL_OK")
</pallas_src>

<mosaic_0001>
module attributes {stable_mosaic.version = 11 : i64} {
  func.func @kernel(%arg0: i32, %arg1: i32, %arg2: memref<1xf32, #tpu.memory_space<smem>>, %arg3: memref<1x1x3x320xf32, #tpu.memory_space<vmem>>, %arg4: memref<1x8x256xf32, #tpu.memory_space<vmem>>, %arg5: memref<8x27xbf16, #tpu.memory_space<vmem>>, %arg6: memref<8x72xbf16, #tpu.memory_space<vmem>>, %arg7: memref<1x8x256xf32, #tpu.memory_space<vmem>>, %arg8: memref<72x288xbf16, #tpu.memory_space<vmem>>, %arg9: memref<8x288xf32, #tpu.memory_space<vmem>>) attributes {dimension_semantics = [#tpu.dimension_semantics<parallel>, #tpu.dimension_semantics<parallel>], iteration_bounds = array<i64: 2, 1>, scalar_prefetch = 0 : i64, scratch_operands = 2 : i64, tpu.core_type = #tpu.core_type<tc>, window_params = [{transform_indices = @transform_0, window_bounds = array<i64: 1>}, {transform_indices = @transform_1, window_bounds = array<i64: 1, 1, 3, 320>}, {transform_indices = @transform_2, window_bounds = array<i64: 1, 8, 256>}, {pipeline_mode = #tpu.pipeline_mode<synchronous>, transform_indices = @transform_3, window_bounds = array<i64: 8, 27>}, {pipeline_mode = #tpu.pipeline_mode<synchronous>, transform_indices = @transform_4, window_bounds = array<i64: 8, 72>}, {transform_indices = @transform_5, window_bounds = array<i64: 1, 8, 256>}]} {
    %0 = tpu.iota {dimensions = array<i32: 1>} : vector<1x288xi32>
    %c16_i32 = arith.constant 16 : i32
    %c0_i32 = arith.constant 0 : i32
    %1 = arith.cmpi eq, %c16_i32, %c0_i32 : i32
    %c1_i32 = arith.constant 1 : i32
    %2 = arith.select %1, %c1_i32, %c16_i32 : i32
    %3 = vector.broadcast %2 : i32 to vector<1x288xi32>
    %4 = arith.remsi %0, %3 : vector<1x288xi32>
    %c0_i32_0 = arith.constant 0 : i32
    %5 = vector.broadcast %c0_i32_0 : i32 to vector<1x288xi32>
    %6 = arith.cmpi ne, %4, %5 : vector<1x288xi32>
    %c0_i32_1 = arith.constant 0 : i32
    %7 = vector.broadcast %c0_i32_1 : i32 to vector<1x288xi32>
    %8 = arith.cmpi slt, %4, %7 : vector<1x288xi32>
    %c0_i32_2 = arith.constant 0 : i32
    %9 = arith.cmpi slt, %2, %c0_i32_2 : i32
    %10 = vector.broadcast %9 : i1 to vector<1x288xi1>
    %11 = vector.broadcast %10 : vector<1x288xi1> to vector<1x288xi1>
    %12 = arith.xori %8, %11 : vector<1x288xi1>
    %13 = arith.andi %12, %6 : vector<1x288xi1>
    %14 = vector.broadcast %2 : i32 to vector<1x288xi32>
    %15 = arith.addi %4, %14 : vector<1x288xi32>
    %16 = arith.select %13, %15, %4 : vector<1x288xi1>, vector<1x288xi32>
    %c0_i32_3 = arith.constant 0 : i32
    %17 = vector.broadcast %c0_i32_3 : i32 to vector<1x288xi32>
    %18 = arith.cmpi eq, %16, %17 : vector<1x288xi32>
    %c15_i32 = arith.constant 15 : i32
    %19 = vector.broadcast %c15_i32 : i32 to vector<1x288xi32>
    %20 = arith.cmpi eq, %16, %19 : vector<1x288xi32>
    %21 = vector.extract_strided_slice %18 {offsets = [0, 0], sizes = [1, 256], strides = [1, 1]} : vector<1x288xi1> to vector<1x256xi1>
    %22 = vector.extract_strided_slice %20 {offsets = [0, 0], sizes = [1, 256], strides = [1, 1]} : vector<1x288xi1> to vector<1x256xi1>
    %c0 = arith.constant 0 : index
    %c0_4 = arith.constant 0 : index
    %c0_5 = arith.constant 0 : index
    %c0_6 = arith.constant 0 : index
    %23 = vector.load %arg3[%c0, %c0_4, %c0_5, %c0_6] : memref<1x1x3x320xf32, #tpu.memory_space<vmem>>, vector<1x1x3x288xf32>
    %24 = vector.shape_cast %23 : vector<1x1x3x288xf32> to vector<3x288xf32>
    %c1_i32_7 = arith.constant 1 : i32
    %25 = tpu.dynamic_rotate %24 by %c1_i32_7 dim 1 : vector<3x288xf32>, i32 -> vector<3x288xf32>
    %26 = vector.shape_cast %18 : vector<1x288xi1> to vector<1x288xi1>
    %27 = vector.broadcast %26 : vector<1x288xi1> to vector<3x288xi1>
    %28 = arith.select %27, %24, %25 : vector<3x288xi1>, vector<3x288xf32>
    %c287_i32 = arith.constant 287 : i32
    %29 = tpu.dynamic_rotate %24 by %c287_i32 dim 1 : vector<3x288xf32>, i32 -> vector<3x288xf32>
    %30 = vector.shape_cast %20 : vector<1x288xi1> to vector<1x288xi1>
    %31 = vector.broadcast %30 : vector<1x288xi1> to vector<3x288xi1>
    %32 = arith.select %31, %24, %29 : vector<3x288xi1>, vector<3x288xf32>
    %c0_8 = arith.constant 0 : index
    %c0_9 = arith.constant 0 : index
    %c0_10 = arith.constant 0 : index
    %c16 = arith.constant 16 : index
    %33 = vector.load %arg3[%c0_8, %c0_9, %c0_10, %c16] : memref<1x1x3x320xf32, #tpu.memory_space<vmem>>, vector<1x1x3x288xf32>
    %34 = vector.shape_cast %33 : vector<1x1x3x288xf32> to vector<3x288xf32>
    %c1_i32_11 = arith.constant 1 : i32
    %35 = tpu.dynamic_rotate %34 by %c1_i32_11 dim 1 : vector<3x288xf32>, i32 -> vector<3x288xf32>
    %36 = vector.shape_cast %18 : vector<1x288xi1> to vector<1x288xi1>
    %37 = vector.broadcast %36 : vector<1x288xi1> to vector<3x288xi1>
    %38 = arith.select %37, %34, %35 : vector<3x288xi1>, vector<3x288xf32>
    %c287_i32_12 = arith.constant 287 : i32
    %39 = tpu.dynamic_rotate %34 by %c287_i32_12 dim 1 : vector<3x288xf32>, i32 -> vector<3x288xf32>
    %40 = vector.shape_cast %20 : vector<1x288xi1> to vector<1x288xi1>
    %41 = vector.broadcast %40 : vector<1x288xi1> to vector<3x288xi1>
    %42 = arith.select %41, %34, %39 : vector<3x288xi1>, vector<3x288xf32>
    %c0_13 = arith.constant 0 : index
    %c0_14 = arith.constant 0 : index
    %c0_15 = arith.constant 0 : index
    %c32 = arith.constant 32 : index
    %43 = vector.load %arg3[%c0_13, %c0_14, %c0_15, %c32] : memref<1x1x3x320xf32, #tpu.memory_space<vmem>>, vector<1x1x3x288xf32>
    %44 = vector.shape_cast %43 : vector<1x1x3x288xf32> to vector<3x288xf32>
    %c1_i32_16 = arith.constant 1 : i32
    %45 = tpu.dynamic_rotate %44 by %c1_i32_16 dim 1 : vector<3x288xf32>, i32 -> vector<3x288xf32>
    %46 = vector.shape_cast %18 : vector<1x288xi1> to vector<1x288xi1>
    %47 = vector.broadcast %46 : vector<1x288xi1> to vector<3x288xi1>
    %48 = arith.select %47, %44, %45 : vector<3x288xi1>, vector<3x288xf32>
    %c287_i32_17 = arith.constant 287 : i32
    %49 = tpu.dynamic_rotate %44 by %c287_i32_17 dim 1 : vector<3x288xf32>, i32 -> vector<3x288xf32>
    %50 = vector.shape_cast %20 : vector<1x288xi1> to vector<1x288xi1>
    %51 = vector.broadcast %50 : vector<1x288xi1> to vector<3x288xi1>
    %52 = arith.select %51, %44, %49 : vector<3x288xi1>, vector<3x288xf32>
    %53 = tpu.concatenate %28, %24, %32, %38, %34, %42, %48, %44, %52 in 0 : vector<3x288xf32>, vector<3x288xf32>, vector<3x288xf32>, vector<3x288xf32>, vector<3x288xf32>, vector<3x288xf32>, vector<3x288xf32>, vector<3x288xf32>, vector<3x288xf32> -> vector<27x288xf32>
    %54 = arith.truncf %53 : vector<27x288xf32> to vector<27x288xbf16>
    %c0_18 = arith.constant 0 : index
    %c0_19 = arith.constant 0 : index
    %55 = vector.load %arg8[%c0_18, %c0_19] : memref<72x288xbf16, #tpu.memory_space<vmem>>, vector<27x288xbf16>
    tpu.vector_store %arg8[%c0_18, %c0_19], %54 {strides = array<i32>} : memref<72x288xbf16, #tpu.memory_space<vmem>>, vector<27x288xbf16>,
    %c0_20 = arith.constant 0 : index
    %c0_21 = arith.constant 0 : index
    %56 = vector.load %arg5[%c0_20, %c0_21] : memref<8x27xbf16, #tpu.memory_space<vmem>>, vector<8x27xbf16>
    %c0_22 = arith.constant 0 : index
    %c0_23 = arith.constant 0 : index
    %57 = vector.load %arg8[%c0_22, %c0_23] : memref<72x288xbf16, #tpu.memory_space<vmem>>, vector<27x288xbf16>
    %cst = arith.constant dense<0.000000e+00> : vector<8x288xf32>
    %58 = tpu.matmul %56, %57, %cst {dimension_numbers = #tpu.dot_dimension_numbers<[1], [0], [0], [1], [0, 0, 1, 1], [], []>} : vector<8x27xbf16>, vector<27x288xbf16>, vector<8x288xf32> -> vector<8x288xf32>
    %c0_24 = arith.constant 0 : index
    %59 = memref.load %arg2[%c0_24] : memref<1xf32, #tpu.memory_space<smem>>
    %cst_25 = arith.constant 0.000000e+00 : f32
    %60 = vector.broadcast %cst_25 : f32 to vector<8x288xf32>
    %61 = arith.cmpf oge, %58, %60 : vector<8x288xf32>
    %62 = vector.broadcast %59 : f32 to vector<8x288xf32>
    %63 = arith.mulf %62, %58 : vector<8x288xf32>
    %64 = arith.select %61, %58, %63 : vector<8x288xi1>, vector<8x288xf32>
    %c0_26 = arith.constant 0 : index
    %c0_27 = arith.constant 0 : index
    %65 = vector.load %arg9[%c0_26, %c0_27] : memref<8x288xf32, #tpu.memory_space<vmem>>, vector<8x288xf32>
    tpu.vector_store %arg9[%c0_26, %c0_27], %64 {strides = array<i32>} : memref<8x288xf32, #tpu.memory_space<vmem>>, vector<8x288xf32>,
    %c0_i32_28 = arith.constant 0 : i32
    %66 = arith.cmpi eq, %arg1, %c0_i32_28 : i32
    %67 = arith.extui %66 : i1 to i32
    %c0_i32_29 = arith.constant 0 : i32
    %68 = arith.cmpi ne, %67, %c0_i32_29 : i32
    scf.if %68 {
      %c0_70 = arith.constant 0 : index
      %c16_71 = arith.constant 16 : index
      %136 = vector.load %arg9[%c0_70, %c16_71] : memref<8x288xf32, #tpu.memory_space<vmem>>, vector<8x16xf32>
      %c0_72 = arith.constant 0 : index
      %c0_73 = arith.constant 0 : index
      %137 = vector.load %arg9[%c0_72, %c0_73] : memref<8x288xf32, #tpu.memory_space<vmem>>, vector<8x16xf32>
      tpu.vector_store %arg9[%c0_72, %c0_73], %136 {strides = array<i32>} : memref<8x288xf32, #tpu.memory_space<vmem>>, vector<8x16xf32>,
    } else {
    }
    %c0_i32_30 = arith.constant 0 : i32
    %69 = arith.cmpi eq, %arg1, %c0_i32_30 : i32
    %70 = arith.extui %69 : i1 to i32
    %c0_i32_31 = arith.constant 0 : i32
    %71 = arith.cmpi ne, %70, %c0_i32_31 : i32
    scf.if %71 {
      %c0_70 = arith.constant 0 : index
      %c256 = arith.constant 256 : index
      %136 = vector.load %arg9[%c0_70, %c256] : memref<8x288xf32, #tpu.memory_space<vmem>>, vector<8x16xf32>
      %c0_71 = arith.constant 0 : index
      %c272 = arith.constant 272 : index
      %137 = vector.load %arg9[%c0_71, %c272] : memref<8x288xf32, #tpu.memory_space<vmem>>, vector<8x16xf32>
      tpu.vector_store %arg9[%c0_71, %c272], %136 {strides = array<i32>} : memref<8x288xf32, #tpu.memory_space<vmem>>, vector<8x16xf32>,
    } else {
    }
    %c0_32 = arith.constant 0 : index
    %c0_33 = arith.constant 0 : index
    %72 = vector.load %arg9[%c0_32, %c0_33] : memref<8x288xf32, #tpu.memory_space<vmem>>, vector<8x256xf32>
    %c1_i32_34 = arith.constant 1 : i32
    %73 = tpu.dynamic_rotate %72 by %c1_i32_34 dim 1 : vector<8x256xf32>, i32 -> vector<8x256xf32>
    %74 = vector.shape_cast %21 : vector<1x256xi1> to vector<1x256xi1>
    %75 = vector.broadcast %74 : vector<1x256xi1> to vector<8x256xi1>
    %76 = arith.select %75, %72, %73 : vector<8x256xi1>, vector<8x256xf32>
    %c255_i32 = arith.constant 255 : i32
    %77 = tpu.dynamic_rotate %72 by %c255_i32 dim 1 : vector<8x256xf32>, i32 -> vector<8x256xf32>
    %78 = vector.shape_cast %22 : vector<1x256xi1> to vector<1x256xi1>
    %79 = vector.broadcast %78 : vector<1x256xi1> to vector<8x256xi1>
    %80 = arith.select %79, %72, %77 : vector<8x256xi1>, vector<8x256xf32>
    %81 = arith.truncf %76 : vector<8x256xf32> to vector<8x256xbf16>
    %c0_35 = arith.constant 0 : index
    %c0_36 = arith.constant 0 : index
    %82 = vector.load %arg8[%c0_35, %c0_36] : memref<72x288xbf16, #tpu.memory_space<vmem>>, vector<8x256xbf16>
    tpu.vector_store %arg8[%c0_35, %c0_36], %81 {strides = array<i32>} : memref<72x288xbf16, #tpu.memory_space<vmem>>, vector<8x256xbf16>,
    %83 = arith.truncf %72 : vector<8x256xf32> to vector<8x256xbf16>
    %c8 = arith.constant 8 : index
    %c0_37 = arith.constant 0 : index
    %84 = vector.load %arg8[%c8, %c0_37] : memref<72x288xbf16, #tpu.memory_space<vmem>>, vector<8x256xbf16>
    tpu.vector_store %arg8[%c8, %c0_37], %83 {strides = array<i32>} : memref<72x288xbf16, #tpu.memory_space<vmem>>, vector<8x256xbf16>,
    %85 = arith.truncf %80 : vector<8x256xf32> to vector<8x256xbf16>
    %c16_38 = arith.constant 16 : index
    %c0_39 = arith.constant 0 : index
    %86 = vector.load %arg8[%c16_38, %c0_39] : memref<72x288xbf16, #tpu.memory_space<vmem>>, vector<8x256xbf16>
    tpu.vector_store %arg8[%c16_38, %c0_39], %85 {strides = array<i32>} : memref<72x288xbf16, #tpu.memory_space<vmem>>, vector<8x256xbf16>,
    %c0_40 = arith.constant 0 : index
    %c16_41 = arith.constant 16 : index
    %87 = vector.load %arg9[%c0_40, %c16_41] : memref<8x288xf32, #tpu.memory_space<vmem>>, vector<8x256xf32>
    %c1_i32_42 = arith.constant 1 : i32
    %88 = tpu.dynamic_rotate %87 by %c1_i32_42 dim 1 : vector<8x256xf32>, i32 -> vector<8x256xf32>
    %89 = vector.shape_cast %21 : vector<1x256xi1> to vector<1x256xi1>
    %90 = vector.broadcast %89 : vector<1x256xi1> to vector<8x256xi1>
    %91 = arith.select %90, %87, %88 : vector<8x256xi1>, vector<8x256xf32>
    %c255_i32_43 = arith.constant 255 : i32
    %92 = tpu.dynamic_rotate %87 by %c255_i32_43 dim 1 : vector<8x256xf32>, i32 -> vector<8x256xf32>
    %93 = vector.shape_cast %22 : vector<1x256xi1> to vector<1x256xi1>
    %94 = vector.broadcast %93 : vector<1x256xi1> to vector<8x256xi1>
    %95 = arith.select %94, %87, %92 : vector<8x256xi1>, vector<8x256xf32>
    %96 = arith.truncf %91 : vector<8x256xf32> to vector<8x256xbf16>
    %c24 = arith.constant 24 : index
    %c0_44 = arith.constant 0 : index
    %97 = vector.load %arg8[%c24, %c0_44] : memref<72x288xbf16, #tpu.memory_space<vmem>>, vector<8x256xbf16>
    tpu.vector_store %arg8[%c24, %c0_44], %96 {strides = array<i32>} : memref<72x288xbf16, #tpu.memory_space<vmem>>, vector<8x256xbf16>,
    %98 = arith.truncf %87 : vector<8x256xf32> to vector<8x256xbf16>
    %c32_45 = arith.constant 32 : index
    %c0_46 = arith.constant 0 : index
    %99 = vector.load %arg8[%c32_45, %c0_46] : memref<72x288xbf16, #tpu.memory_space<vmem>>, vector<8x256xbf16>
    tpu.vector_store %arg8[%c32_45, %c0_46], %98 {strides = array<i32>} : memref<72x288xbf16, #tpu.memory_space<vmem>>, vector<8x256xbf16>,
    %100 = arith.truncf %95 : vector<8x256xf32> to vector<8x256xbf16>
    %c40 = arith.constant 40 : index
    %c0_47 = arith.constant 0 : index
    %101 = vector.load %arg8[%c40, %c0_47] : memref<72x288xbf16, #tpu.memory_space<vmem>>, vector<8x256xbf16>
    tpu.vector_store %arg8[%c40, %c0_47], %100 {strides = array<i32>} : memref<72x288xbf16, #tpu.memory_space<vmem>>, vector<8x256xbf16>,
    %c0_48 = arith.constant 0 : index
    %c32_49 = arith.constant 32 : index
    %102 = vector.load %arg9[%c0_48, %c32_49] : memref<8x288xf32, #tpu.memory_space<vmem>>, vector<8x256xf32>
    %c1_i32_50 = arith.constant 1 : i32
    %103 = tpu.dynamic_rotate %102 by %c1_i32_50 dim 1 : vector<8x256xf32>, i32 -> vector<8x256xf32>
    %104 = vector.shape_cast %21 : vector<1x256xi1> to vector<1x256xi1>
    %105 = vector.broadcast %104 : vector<1x256xi1> to vector<8x256xi1>
    %106 = arith.select %105, %102, %103 : vector<8x256xi1>, vector<8x256xf32>
    %c255_i32_51 = arith.constant 255 : i32
    %107 = tpu.dynamic_rotate %102 by %c255_i32_51 dim 1 : vector<8x256xf32>, i32 -> vector<8x256xf32>
    %108 = vector.shape_cast %22 : vector<1x256xi1> to vector<1x256xi1>
    %109 = vector.broadcast %108 : vector<1x256xi1> to vector<8x256xi1>
    %110 = arith.select %109, %102, %107 : vector<8x256xi1>, vector<8x256xf32>
    %111 = arith.truncf %106 : vector<8x256xf32> to vector<8x256xbf16>
    %c48 = arith.constant 48 : index
    %c0_52 = arith.constant 0 : index
    %112 = vector.load %arg8[%c48, %c0_52] : memref<72x288xbf16, #tpu.memory_space<vmem>>, vector<8x256xbf16>
    tpu.vector_store %arg8[%c48, %c0_52], %111 {strides = array<i32>} : memref<72x288xbf16, #tpu.memory_space<vmem>>, vector<8x256xbf16>,
    %113 = arith.truncf %102 : vector<8x256xf32> to vector<8x256xbf16>
    %c56 = arith.constant 56 : index
    %c0_53 = arith.constant 0 : index
    %114 = vector.load %arg8[%c56, %c0_53] : memref<72x288xbf16, #tpu.memory_space<vmem>>, vector<8x256xbf16>
    tpu.vector_store %arg8[%c56, %c0_53], %113 {strides = array<i32>} : memref<72x288xbf16, #tpu.memory_space<vmem>>, vector<8x256xbf16>,
    %115 = arith.truncf %110 : vector<8x256xf32> to vector<8x256xbf16>
    %c64 = arith.constant 64 : index
    %c0_54 = arith.constant 0 : index
    %116 = vector.load %arg8[%c64, %c0_54] : memref<72x288xbf16, #tpu.memory_space<vmem>>, vector<8x256xbf16>
    tpu.vector_store %arg8[%c64, %c0_54], %115 {strides = array<i32>} : memref<72x288xbf16, #tpu.memory_space<vmem>>, vector<8x256xbf16>,
    %c0_55 = arith.constant 0 : index
    %c0_56 = arith.constant 0 : index
    %117 = vector.load %arg6[%c0_55, %c0_56] : memref<8x72xbf16, #tpu.memory_space<vmem>>, vector<8x72xbf16>
    %c0_57 = arith.constant 0 : index
    %c0_58 = arith.constant 0 : index
    %118 = vector.load %arg8[%c0_57, %c0_58] : memref<72x288xbf16, #tpu.memory_space<vmem>>, vector<72x256xbf16>
    %cst_59 = arith.constant dense<0.000000e+00> : vector<8x256xf32>
    %119 = tpu.matmul %117, %118, %cst_59 {dimension_numbers = #tpu.dot_dimension_numbers<[1], [0], [0], [1], [0, 0, 1, 1], [], []>} : vector<8x72xbf16>, vector<72x256xbf16>, vector<8x256xf32> -> vector<8x256xf32>
    %cst_60 = arith.constant 0.000000e+00 : f32
    %120 = vector.broadcast %cst_60 : f32 to vector<8x256xf32>
    %121 = arith.subf %120, %119 : vector<8x256xf32>
    %cst_61 = arith.constant 8.000000e+01 : f32
    %122 = vector.broadcast %cst_61 : f32 to vector<8x256xf32>
    %123 = arith.minimumf %121, %122 : vector<8x256xf32>
    %124 = math.exp %123 : vector<8x256xf32>
    %cst_62 = arith.constant 1.000000e+00 : f32
    %125 = vector.broadcast %cst_62 : f32 to vector<8x256xf32>
    %126 = arith.addf %125, %124 : vector<8x256xf32>
    %127 = tpu.reciprocal %126 {approx = true} : vector<8x256xf32> -> vector<8x256xf32>
    %c0_63 = arith.constant 0 : index
    %c0_64 = arith.constant 0 : index
    %c0_65 = arith.constant 0 : index
    %128 = vector.load %arg4[%c0_63, %c0_64, %c0_65] : memref<1x8x256xf32, #tpu.memory_space<vmem>>, vector<1x8x256xf32>
    %129 = vector.shape_cast %128 : vector<1x8x256xf32> to vector<8x256xf32>
    %cst_66 = arith.constant 1.000000e+00 : f32
    %130 = vector.broadcast %cst_66 : f32 to vector<8x256xf32>
    %131 = arith.addf %130, %127 : vector<8x256xf32>
    %132 = arith.mulf %129, %131 : vector<8x256xf32>
    %c0_67 = arith.constant 0 : index
    %c0_68 = arith.constant 0 : index
    %c0_69 = arith.constant 0 : index
    %133 = vector.load %arg7[%c0_67, %c0_68, %c0_69] : memref<1x8x256xf32, #tpu.memory_space<vmem>>, vector<1x8x256xf32>
    %134 = vector.shape_cast %133 : vector<1x8x256xf32> to vector<8x256xf32>
    %135 = vector.shape_cast %132 : vector<8x256xf32> to vector<1x8x256xf32>
    tpu.vector_store %arg7[%c0_67, %c0_68, %c0_69], %135 {strides = array<i32>} : memref<1x8x256xf32, #tpu.memory_space<vmem>>, vector<1x8x256xf32>,
    return
  }
  func.func @transform_0(%arg0: i32, %arg1: i32) -> i32 {
    %c0_i32 = arith.constant 0 : i32
    %c0_i32_0 = arith.constant 0 : i32
    return %c0_i32 : i32
  }
  func.func @transform_1(%arg0: i32, %arg1: i32) -> (i32, i32, i32, i32) {
    %c0_i32 = arith.constant 0 : i32
    %c0_i32_0 = arith.constant 0 : i32
    %c0_i32_1 = arith.constant 0 : i32
    return %arg0, %arg1, %c0_i32, %c0_i32_0 : i32, i32, i32, i32
  }
  func.func @transform_2(%arg0: i32, %arg1: i32) -> (i32, i32, i32) {
    %c0_i32 = arith.constant 0 : i32
    %c0_i32_0 = arith.constant 0 : i32
    return %arg0, %c0_i32, %arg1 : i32, i32, i32
  }
  func.func @transform_3(%arg0: i32, %arg1: i32) -> (i32, i32) {
    %c0_i32 = arith.constant 0 : i32
    %c0_i32_0 = arith.constant 0 : i32
    %c0_i32_1 = arith.constant 0 : i32
    return %c0_i32, %c0_i32_0 : i32, i32
  }
  func.func @transform_4(%arg0: i32, %arg1: i32) -> (i32, i32) {
    %c0_i32 = arith.constant 0 : i32
    %c0_i32_0 = arith.constant 0 : i32
    %c0_i32_1 = arith.constant 0 : i32
    return %c0_i32, %c0_i32_0 : i32, i32
  }
  func.func @transform_5(%arg0: i32, %arg1: i32) -> (i32, i32, i32) {
    %c0_i32 = arith.constant 0 : i32
    %c0_i32_0 = arith.constant 0 : i32
    return %arg0, %c0_i32, %arg1 : i32, i32, i32
  }
}

</mosaic_0001>

<llo_original>
// kernel: tpu_custom_call.1
$region0: #{tpu_custom_call.1}
  #allocation0 [shape = 'u32[]', space=smem, size = 0x4, offset = 0x4, fixed_abs, tag = 'smem constant byte address 0x4 - core index']
  #allocation1 [shape = 'u32[144,128]{1,0:T(1,128)}', space=vmem, size = 0x12000, scoped, tag = 'internal scratch']
  #allocation2 [shape = 'bf16[72,288]{1,0:T(8,128)(2,1)}', space=vmem, size = 0xd800, scoped, tag = 'scratch operand']
  #allocation3 [shape = 'f32[8,288]{1,0:T(8,128)}', space=vmem, size = 0x3000, scoped, tag = 'scratch operand']
  #allocation4 [shape = 'f32[1]{0:T(128)S(6)}', space=smem, size = 0x200, scoped, tag = 'scoped memory for tpu_custom_call.1']
  %s0 = inlined_call_operand.<no memory space> [shape: f32[1], index: 0, kind: input, shape index: {}]
  %s1 = inlined_call_operand.vmem [shape: f32[2,1,3,320], index: 1, kind: input, shape index: {}]
  %s2 = inlined_call_operand.vmem [shape: f32[2,8,256], index: 2, kind: input, shape index: {}]
  %s3 = inlined_call_operand.vmem [shape: bf16[8,27], index: 3, kind: input, shape index: {}]
  %s4 = inlined_call_operand.vmem [shape: bf16[8,72], index: 4, kind: input, shape index: {}]
  %s5 = inlined_call_operand.hbm [shape: f32[2,8,256], index: 5, kind: output, shape index: {}]
  %s6 = sld [smem:[#allocation0]]
  $region57: #{tpu_custom_call.1} parent=0
    _
  %s8 = ssub.s32 1, %s6
  %s9 = scalar_select 0, %s8, %s6
  %10 = sst [smem:[#allocation4]] %s0
  $region1: #{tpu_custom_call.1} parent=0
    #allocation5 [shape = 'u8[16384]{0}', space=vmem, size = 0x4000, scoped, tag = 'output window, operand 0']
    #allocation6 [shape = 's32[2]{0}', space=sflag, size = 0x8, scoped, tag = 'scoped memory for tpu_custom_call.1']
    %11 = vsyncpa [#allocation6], 0
    %s12 = scalar_lea.sflag [#allocation6], 1
    %13 = vsyncpa %s12, 0
    loop: start=0, step=1, limit=4
    $region2: #{tpu_custom_call.1} parent=1 // loop_pre_header
      _
    $region3: #{tpu_custom_call.1} parent=1 // loop_header
      %s15 = sphi 0, %s19
      %p16 = scmp.ge.s32.totalorder %s15, 4
      %s22 = sphi 0, %s34
      %s23 = sphi 0, %s30
      %s24 = sphi 0, %s22
      %s25 = sphi 0, %s23
      %s26 = sphi 0, %s24
      %s27 = sphi 0, %s25
      %s35 = sphi 0, %s35
      %s37 = sphi 0, %s35
      %s38 = sphi 0, %s37
      %s52 = sphi 0, %s38
      %s60 = sphi 0, %s62
      %s63 = sphi 0, %s60
      %s64 = sphi 0, %s63
      %s80 = sphi 0, %s64
      %s88 = sphi 0, %s90
      %s91 = sphi 0, %s88
      %s92 = sphi 0, %s91
      %s108 = sphi 0, %s92
      %s112 = sphi 0, %s112
      %s114 = sphi 0, %s112
      %s115 = sphi 0, %s114
      %s129 = sphi 0, %s115
      %s133 = sphi 0, %s133
      %s135 = sphi 0, %s133
      %s136 = sphi 0, %s135
      %s150 = sphi 0, %s136
      %s158 = sphi 0, %s160
      %s161 = sphi 0, %s158
      %s162 = sphi 0, %s161
      %s178 = sphi 0, %s162
    $region4: #{tpu_custom_call.1} parent=1 // loop_header_branch
      %18 = sbr.rel (%p16) target = $region8
    $region5: #{tpu_custom_call.1} parent=1 // loop_body
      %s20 = ssub.s32 %s15, 1
      %s21 = ssub.s32 %s15, 2
      %s28 = sadd.s32 1, %s23
      %p29 = scmp.ge.s32.totalorder %s28, 1
      %s30 = scalar_select %p29, 0, %s28
      %s31 = sadd.s32 1, %s22
      %s32 = scalar_select %p29, %s31, %s22
      %p33 = scmp.ge.s32.totalorder %s32, 2
      %s34 = scalar_select %p33, 0, %s32
      %s36 = sadd.s32 %s35, 1
      %p39 = scmp.eq.s32.totalorder %s15, 1
      %p40 = scmp.ne.s32.totalorder %s35, %s37
      %p41 = scmp.eq.s32.totalorder %s15, 0
      %p42 = por %p40, %p41
      %p43 = scmp.ne.s32.totalorder %s35, %s37
      %p44 = scmp.eq.s32.totalorder %s20, 1
      %p45 = por %p43, %p44
      %p46 = scmp.ne.s32.totalorder %s37, %s38
      %p47 = scmp.eq.s32.totalorder %s20, 0
      %p48 = por %p46, %p47
      %p49 = scmp.ne.s32.totalorder %s37, %s38
      %p50 = scmp.eq.s32.totalorder %s21, 1
      %p51 = por %p49, %p50
      %p53 = scmp.ne.s32.totalorder %s38, %s52
      %p54 = scmp.eq.s32.totalorder %s21, 0
      %p55 = por %p53, %p54
      %s56 = ssub.s32 %s22, %s34
      %s57 = ssub.s32 %s23, %s30
      %s58 = sor.u32 %s56, %s57
      %p59 = scmp.eq.s32.totalorder %s58, 0
      %s61 = sadd.s32 %s60, 1
      %s62 = scalar_select %p59, %s60, %s61
      %p65 = pneg %p59
      %p66 = scmp.eq.s32.totalorder %s15, 1
      %p67 = por %p65, %p66
      %p68 = scmp.ne.s32.totalorder %s60, %s63
      %p69 = scmp.eq.s32.totalorder %s15, 0
      %p70 = por %p68, %p69
      %p71 = scmp.ne.s32.totalorder %s60, %s63
      %p72 = scmp.eq.s32.totalorder %s20, 1
      %p73 = por %p71, %p72
      %p74 = scmp.ne.s32.totalorder %s63, %s64
      %p75 = scmp.eq.s32.totalorder %s20, 0
      %p76 = por %p74, %p75
      %p77 = scmp.ne.s32.totalorder %s63, %s64
      %p78 = scmp.eq.s32.totalorder %s21, 1
      %p79 = por %p77, %p78
      %p81 = scmp.ne.s32.totalorder %s64, %s80
      %p82 = scmp.eq.s32.totalorder %s21, 0
      %p83 = por %p81, %p82
      %s84 = ssub.s32 %s22, %s34
      %s85 = ssub.s32 %s23, %s30
      %s86 = sor.u32 %s84, %s85
      %p87 = scmp.eq.s32.totalorder %s86, 0
      %s89 = sadd.s32 %s88, 1
      %s90 = scalar_select %p87, %s88, %s89
      %p93 = pneg %p87
      %p94 = scmp.eq.s32.totalorder %s15, 1
      %p95 = por %p93, %p94
      %p96 = scmp.ne.s32.totalorder %s88, %s91
      %p97 = scmp.eq.s32.totalorder %s15, 0
      %p98 = por %p96, %p97
      %p99 = scmp.ne.s32.totalorder %s88, %s91
      %p100 = scmp.eq.s32.totalorder %s20, 1
      %p101 = por %p99, %p100
      %p102 = scmp.ne.s32.totalorder %s91, %s92
      %p103 = scmp.eq.s32.totalorder %s20, 0
      %p104 = por %p102, %p103
      %p105 = scmp.ne.s32.totalorder %s91, %s92
      %p106 = scmp.eq.s32.totalorder %s21, 1
      %p107 = por %p105, %p106
      %p109 = scmp.ne.s32.totalorder %s92, %s108
      %p110 = scmp.eq.s32.totalorder %s21, 0
      %p111 = por %p109, %p110
      %s113 = sadd.s32 %s112, 1
      %p116 = scmp.eq.s32.totalorder %s15, 1
      %p117 = scmp.ne.s32.totalorder %s112, %s114
      %p118 = scmp.eq.s32.totalorder %s15, 0
      %p119 = por %p117, %p118
      %p120 = scmp.ne.s32.totalorder %s112, %s114
      %p121 = scmp.eq.s32.totalorder %s20, 1
      %p122 = por %p120, %p121
      %p123 = scmp.ne.s32.totalorder %s114, %s115
      %p124 = scmp.eq.s32.totalorder %s20, 0
      %p125 = por %p123, %p124
      %p126 = scmp.ne.s32.totalorder %s114, %s115
      %p127 = scmp.eq.s32.totalorder %s21, 1
      %p128 = por %p126, %p127
      %p130 = scmp.ne.s32.totalorder %s115, %s129
      %p131 = scmp.eq.s32.totalorder %s21, 0
      %p132 = por %p130, %p131
      %s134 = sadd.s32 %s133, 1
      %p137 = scmp.eq.s32.totalorder %s15, 1
      %p138 = scmp.ne.s32.totalorder %s133, %s135
      %p139 = scmp.eq.s32.totalorder %s15, 0
      %p140 = por %p138, %p139
      %p141 = scmp.ne.s32.totalorder %s133, %s135
      %p142 = scmp.eq.s32.totalorder %s20, 1
      %p143 = por %p141, %p142
      %p144 = scmp.ne.s32.totalorder %s135, %s136
      %p145 = scmp.eq.s32.totalorder %s20, 0
      %p146 = por %p144, %p145
      %p147 = scmp.ne.s32.totalorder %s135, %s136
      %p148 = scmp.eq.s32.totalorder %s21, 1
      %p149 = por %p147, %p148
      %p151 = scmp.ne.s32.totalorder %s136, %s150
      %p152 = scmp.eq.s32.totalorder %s21, 0
      %p153 = por %p151, %p152
      %s154 = ssub.s32 %s22, %s34
      %s155 = ssub.s32 %s23, %s30
      %s156 = sor.u32 %s154, %s155
      %p157 = scmp.eq.s32.totalorder %s156, 0
      %s159 = sadd.s32 %s158, 1
      %s160 = scalar_select %p157, %s158, %s159
      %p163 = pneg %p157
      %p164 = scmp.eq.s32.totalorder %s15, 1
      %p165 = por %p163, %p164
      %p166 = scmp.ne.s32.totalorder %s158, %s161
      %p167 = scmp.eq.s32.totalorder %s15, 0
      %p168 = por %p166, %p167
      %p169 = scmp.ne.s32.totalorder %s158, %s161
      %p170 = scmp.eq.s32.totalorder %s20, 1
      %p171 = por %p169, %p170
      %p172 = scmp.ne.s32.totalorder %s161, %s162
      %p173 = scmp.eq.s32.totalorder %s20, 0
      %p174 = por %p172, %p173
      %p175 = scmp.ne.s32.totalorder %s161, %s162
      %p176 = scmp.eq.s32.totalorder %s21, 1
      %p177 = por %p175, %p176
      %p179 = scmp.ne.s32.totalorder %s162, %s178
      %p180 = scmp.eq.s32.totalorder %s21, 0
      %p181 = por %p179, %p180
      %p182 = scmp.le.s32.totalorder 1, %s15
      %p183 = scmp.lt.s32.totalorder %s15, 3
      %p184 = pnand %p182, %p183
      %p185 = pneg %p184
      // Predicated region
      $region9: #{tpu_custom_call.1} parent=5 // pred_check
        _
      $region10: #{tpu_custom_call.1} parent=5 // pred_check_branch
        %187 = sbr.rel (%p184) target = $region12
      $region11: #{tpu_custom_call.1} parent=5 // pred_region
        %s188 = ssub.s32 %s15, 1
        // Predicated region
        $region13: #{tpu_custom_call.1} parent=11 // pred_check
          %p189 = pneg %p48
        $region14: #{tpu_custom_call.1} parent=11 // pred_check_branch
          %191 = sbr.rel (%p189) target = $region16
        $region15: #{tpu_custom_call.1} parent=11 // pred_region
          _
        $region16: #{tpu_custom_call.1} parent=11 // pred_fallthru
          _
        // Predicated region
        $region17: #{tpu_custom_call.1} parent=11 // pred_check
          %p192 = pneg %p125
        $region18: #{tpu_custom_call.1} parent=11 // pred_check_branch
          %194 = sbr.rel (%p192) target = $region20
        $region19: #{tpu_custom_call.1} parent=11 // pred_region
          _
        $region20: #{tpu_custom_call.1} parent=11 // pred_fallthru
          _
        // Predicated region
        $region21: #{tpu_custom_call.1} parent=11 // pred_check
          %p195 = pneg %p146
        $region22: #{tpu_custom_call.1} parent=11 // pred_check_branch
          %197 = sbr.rel (%p195) target = $region24
        $region23: #{tpu_custom_call.1} parent=11 // pred_region
          _
        $region24: #{tpu_custom_call.1} parent=11 // pred_fallthru
          _
      $region12: #{tpu_custom_call.1} parent=5 // pred_fallthru
        _
      %p198 = scmp.lt.s32.totalorder %s15, 2
      // Predicated region
      $region25: #{tpu_custom_call.1} parent=5 // pred_check
        %p199 = pneg %p198
      $region26: #{tpu_custom_call.1} parent=5 // pred_check_branch
        %201 = sbr.rel (%p199) target = $region28
      $region27: #{tpu_custom_call.1} parent=5 // pred_region
        // Predicated region
        $region29: #{tpu_custom_call.1} parent=27 // pred_check
          %p202 = pneg %p70
        $region30: #{tpu_custom_call.1} parent=27 // pred_check_branch
          %204 = sbr.rel (%p202) target = $region32
        $region31: #{tpu_custom_call.1} parent=27 // pred_region
          %p205 = scmp.lt.s32.totalorder %s22, 1
          %s206 = scalar_select %p205, %s22, 1
          %p207 = scmp.lt.s32.totalorder %s23, 0
          %s208 = scalar_select %p207, %s23, 0
          %s209 = smul.addr %s208, 3
          %s210 = smul.addr %s206, 3
          %s211 = sadd.s32 %s209, %s210
          %s212 = smul.addr %s211, 4
          %s213 = scalar_lea.vmem %s1, %s212
        $region32: #{tpu_custom_call.1} parent=27 // pred_fallthru
          _
        // Predicated region
        $region33: #{tpu_custom_call.1} parent=27 // pred_check
          %p214 = pneg %p98
        $region34: #{tpu_custom_call.1} parent=27 // pred_check_branch
          %216 = sbr.rel (%p214) target = $region36
        $region35: #{tpu_custom_call.1} parent=27 // pred_region
          %s217 = smul.u32 2, %s23
          %p218 = scmp.lt.s32.totalorder %s22, 1
          %s219 = scalar_select %p218, %s22, 1
          %p220 = scmp.lt.s32.totalorder %s217, 1
          %s221 = scalar_select %p220, %s217, 1
          %s222 = smul.addr %s219, 2
          %s223 = sadd.s32 %s221, %s222
          %s224 = smul.addr %s223, 8
          %s225 = scalar_lea.vmem %s2, %s224
          %s226 = smul.u32 2, %s23
        $region36: #{tpu_custom_call.1} parent=27 // pred_fallthru
          _
      $region28: #{tpu_custom_call.1} parent=5 // pred_fallthru
        _
      %p227 = scmp.le.s32.totalorder 1, %s15
      %p228 = scmp.lt.s32.totalorder %s15, 3
      %p229 = pnand %p227, %p228
      %p230 = pneg %p229
      // Predicated region
      $region37: #{tpu_custom_call.1} parent=5 // pred_check
        _
      $region38: #{tpu_custom_call.1} parent=5 // pred_check_branch
        %232 = sbr.rel (%p229) target = $region40
      $region39: #{tpu_custom_call.1} parent=5 // pred_region
        %s233 = ssub.s32 %s15, 1
        %p234 = pneg %p48
        %p235 = pneg %p45
        %p236 = scmp.lt.s32.totalorder %s24, 1
        %s237 = scalar_select %p236, %s24, 1
        %p238 = scmp.lt.s32.totalorder %s25, 0
        %s239 = scalar_select %p238, %s25, 0
        %s240 = smul.addr %s239, 3
        %s241 = smul.addr %s237, 3
        %s242 = sadd.s32 %s240, %s241
        %s243 = smul.addr %s242, 4
        %s244 = scalar_lea.vmem %s1, %s243
        %p245 = pneg %p76
        %p246 = pneg %p73
        %s247 = smul.u32 2, %s25
        %p248 = scmp.lt.s32.totalorder %s24, 1
        %s249 = scalar_select %p248, %s24, 1
        %p250 = scmp.lt.s32.totalorder %s247, 1
        %s251 = scalar_select %p250, %s247, 1
        %s252 = smul.addr %s249, 2
        %s253 = sadd.s32 %s251, %s252
        %s254 = smul.addr %s253, 8
        %s255 = scalar_lea.vmem %s2, %s254
        %p256 = pneg %p104
        %p257 = pneg %p101
        %p258 = pneg %p125
        %p259 = pneg %p122
        %p260 = pneg %p146
        %p261 = pneg %p143
        %p262 = pneg %p174
        %p263 = pneg %p171
        %s264 = sand.u32 %s161, 1
        %s265 = scalar_lea.sflag [#allocation6], %s264
        %s266 = sand.u32 %s161, 1
        %s267 = smul.addr %s266, 16
        %s268 = scalar_lea.vmem [#allocation5], %s267
        %p269 = scmp.lt.s32.totalorder %s24, 1
        %s270 = scalar_select %p269, %s24, 1
        %p271 = scmp.lt.s32.totalorder %s25, 0
        %s272 = scalar_select %p271, %s25, 0
        %s273 = smul.addr %s272, 3
        %s274 = smul.addr %s270, 3
        %s275 = sadd.s32 %s273, %s274
        %s276 = smul.addr %s275, 4
        %s277 = scalar_lea.vmem %s1, %s276
        %s278 = smul.u32 2, %s25
        %p279 = scmp.lt.s32.totalorder %s24, 1
        %s280 = scalar_select %p279, %s24, 1
        %p281 = scmp.lt.s32.totalorder %s278, 1
        %s282 = scalar_select %p281, %s278, 1
        %s283 = smul.addr %s280, 2
        %s284 = sadd.s32 %s282, %s283
        %s285 = smul.addr %s284, 8
        %s286 = scalar_lea.vmem %s2, %s285
        %s287 = smul.u32 2, %s25
        %s288 = smul.u32 2, %s25
        %v290 = vlaneseq
        %v291 = vand.u32 %v290, 127
        %v292 = vadd.s32 %v291, 128
        %v293 = vadd.s32 %v291, 256
        %vm294 = vcmp.lt.s32.totalorder %v291, 0
        %v295 = vsub.s32 0, %v291
        %v296 = vsel %vm294, %v295, %v291
        %v297 = vshrl.u32 %v296, 4
        %v298 = vand.u32 %v296, 15
        %v299 = vsub.s32 0, %v298
        %v300 = vsel %vm294, %v299, %v298
        %vm301 = vcmp.lt.s32.totalorder %v292, 0
        %v302 = vsub.s32 0, %v292
        %v303 = vsel %vm301, %v302, %v292
        %v304 = vshrl.u32 %v303, 4
        %v305 = vand.u32 %v303, 15
        %v306 = vsub.s32 0, %v305
        %v307 = vsel %vm301, %v306, %v305
        %vm308 = vcmp.lt.s32.totalorder %v293, 0
        %v309 = vsub.s32 0, %v293
        %v310 = vsel %vm308, %v309, %v293
        %v311 = vshrl.u32 %v310, 4
        %v312 = vand.u32 %v310, 15
        %v313 = vsub.s32 0, %v312
        %v314 = vsel %vm308, %v313, %v312
        %vm315 = vcmp.ne.s32.totalorder %v300, 0
        %vm316 = vcmp.ne.s32.totalorder %v307, 0
        %vm317 = vcmp.ne.s32.totalorder %v314, 0
        %vm318 = vcmp.lt.s32.totalorder %v300, 0
        %vm319 = vcmp.lt.s32.totalorder %v307, 0
        %vm320 = vcmp.lt.s32.totalorder %v314, 0
        %vm321 = vmand %vm318, %vm315
        %vm322 = vmand %vm319, %vm316
        %vm323 = vmand %vm320, %vm317
        %v324 = vadd.s32 %v300, 16
        %v325 = vadd.s32 %v307, 16
        %v326 = vadd.s32 %v314, 16
        %v327 = vsel %vm321, %v324, %v300
        %v328 = vsel %vm322, %v325, %v307
        %v329 = vsel %vm323, %v326, %v314
        %vm330 = vcmp.eq.s32.totalorder %v327, 0
        %vm331 = vcmp.eq.s32.totalorder %v328, 0
        %vm332 = vcmp.eq.s32.totalorder %v329, 0
        %vm333 = vcmp.eq.s32.totalorder %v327, 15
        %vm334 = vcmp.eq.s32.totalorder %v328, 15
        %vm335 = vcmp.eq.s32.totalorder %v329, 15
        %v336 = vld [vmem:[%s277] sm:$0x77]
        %v337 = vld [vmem:[%s277 + $0x8] sm:$0x7]
        %v340 = vcombine.high %v336, %v336
        %vm342 = vcmask 1047808
        %343 = vrot.lane.b32.xlu0 %v336, 32
        %v344 = vpop.permute.xlu0 %343
        %v345 = vsel %vm342, %v344, %v337
        %346 = vrot.lane.b32.xlu0 %v340, 32
        %v347 = vpop.permute.xlu0 %346
        %348 = vrot.lane.b32.xlu0 %v345, 32
        %v349 = vpop.permute.xlu0 %348
        %v350 = vsel %vm342, %v347, %v344
        %v351 = vsel %vm342, %v349, %v347
        %v352 = vsel %vm330, 1, 0
        %v353 = vsel %vm331, 1, 0
        %v354 = vsel %vm332, 1, 0
        %vm355 = vcmp.eq.s32.totalorder %v352, 1
        %vm356 = vcmp.eq.s32.totalorder %v353, 1
        %vm357 = vcmp.eq.s32.totalorder %v354, 1
        %361 = vrot.lane.b32.xlu0 %v345, 97
        %v362 = vpop.permute.xlu0 %361
        %363 = vrot.lane.b32.xlu0 %v350, 97
        %v364 = vpop.permute.xlu0 %363
        %365 = vrot.lane.b32.xlu0 %v351, 97
        %v366 = vpop.permute.xlu0 %365
        %vm367 = vcmask 793600
        %v368 = vsel %vm367, %v362, %v364
        %v369 = vsel %vm367, %v364, %v366
        %v373 = vsel %vm355, %v336, %v368
        %v374 = vsel %vm356, %v340, %v369
        %v375 = vsel %vm357, %v337, %v366
        %v376 = vsel %vm333, 1, 0
        %v377 = vsel %vm334, 1, 0
        %v378 = vsel %vm335, 1, 0
        %vm379 = vcmp.eq.s32.totalorder %v376, 1
        %vm380 = vcmp.eq.s32.totalorder %v377, 1
        %vm381 = vcmp.eq.s32.totalorder %v378, 1
        %382 = vrot.lane.b32.xlu0 %v336, 127
        %v383 = vpop.permute.xlu0 %382
        %384 = vrot.lane.b32.xlu0 %v340, 127
        %v385 = vpop.permute.xlu0 %384
        %386 = vrot.lane.b32.xlu0 %v345, 127
        %v387 = vpop.permute.xlu0 %386
        %vm388 = vcmask 1039360
        %v389 = vsel %vm388, %v383, %v385
        %v390 = vsel %vm388, %v385, %v387
        %v394 = vsel %vm379, %v336, %v389
        %v395 = vsel %vm380, %v340, %v390
        %v396 = vsel %vm381, %v337, %v387
        %397 = vrot.lane.b32.xlu0 %v336, 112
        %v398 = vpop.permute.xlu0 %397
        %399 = vrot.lane.b32.xlu0 %v340, 112
        %v400 = vpop.permute.xlu0 %399
        %401 = vrot.lane.b32.xlu0 %v337, 112
        %v402 = vpop.permute.xlu0 %401
        %vm403 = vcmask 916480
        %v404 = vsel %vm403, %v398, %v400
        %v405 = vsel %vm403, %v400, %v402
        %409 = vrot.lane.b32.xlu0 %v404, 32
        %v410 = vpop.permute.xlu0 %409
        %v411 = vsel %vm342, %v410, %v402
        %412 = vrot.lane.b32.xlu0 %v405, 32
        %v413 = vpop.permute.xlu0 %412
        %414 = vrot.lane.b32.xlu0 %v411, 32
        %v415 = vpop.permute.xlu0 %414
        %v416 = vsel %vm342, %v413, %v410
        %v417 = vsel %vm342, %v415, %v413
        %421 = vrot.lane.b32.xlu0 %v411, 97
        %v422 = vpop.permute.xlu0 %421
        %423 = vrot.lane.b32.xlu0 %v416, 97
        %v424 = vpop.permute.xlu0 %423
        %425 = vrot.lane.b32.xlu0 %v417, 97
        %v426 = vpop.permute.xlu0 %425
        %v427 = vsel %vm367, %v422, %v424
        %v428 = vsel %vm367, %v424, %v426
        %v432 = vsel %vm355, %v404, %v427
        %v433 = vsel %vm356, %v405, %v428
        %v434 = vsel %vm357, %v402, %v426
        %435 = vrot.lane.b32.xlu0 %v404, 127
        %v436 = vpop.permute.xlu0 %435
        %437 = vrot.lane.b32.xlu0 %v405, 127
        %v438 = vpop.permute.xlu0 %437
        %439 = vrot.lane.b32.xlu0 %v411, 127
        %v440 = vpop.permute.xlu0 %439
        %v441 = vsel %vm388, %v436, %v438
        %v442 = vsel %vm388, %v438, %v440
        %v446 = vsel %vm379, %v404, %v441
        %v447 = vsel %vm380, %v405, %v442
        %v448 = vsel %vm381, %v402, %v440
        %449 = vrot.lane.b32.xlu0 %v336, 96
        %v450 = vpop.permute.xlu0 %449
        %451 = vrot.lane.b32.xlu0 %v340, 96
        %v452 = vpop.permute.xlu0 %451
        %453 = vrot.lane.b32.xlu0 %v337, 96
        %v454 = vpop.permute.xlu0 %453
        %vm455 = vcmask 785408
        %v456 = vsel %vm455, %v450, %v452
        %v457 = vsel %vm455, %v452, %v454
        %461 = vrot.lane.b32.xlu0 %v456, 32
        %v462 = vpop.permute.xlu0 %461
        %v463 = vsel %vm342, %v462, %v454
        %464 = vrot.lane.b32.xlu0 %v457, 32
        %v465 = vpop.permute.xlu0 %464
        %466 = vrot.lane.b32.xlu0 %v463, 32
        %v467 = vpop.permute.xlu0 %466
        %v468 = vsel %vm342, %v465, %v462
        %v469 = vsel %vm342, %v467, %v465
        %473 = vrot.lane.b32.xlu0 %v463, 97
        %v474 = vpop.permute.xlu0 %473
        %475 = vrot.lane.b32.xlu0 %v468, 97
        %v476 = vpop.permute.xlu0 %475
        %477 = vrot.lane.b32.xlu0 %v469, 97
        %v478 = vpop.permute.xlu0 %477
        %v479 = vsel %vm367, %v474, %v476
        %v480 = vsel %vm367, %v476, %v478
        %v484 = vsel %vm355, %v456, %v479
        %v485 = vsel %vm356, %v457, %v480
        %v486 = vsel %vm357, %v454, %v478
        %487 = vrot.lane.b32.xlu0 %v456, 127
        %v488 = vpop.permute.xlu0 %487
        %489 = vrot.lane.b32.xlu0 %v457, 127
        %v490 = vpop.permute.xlu0 %489
        %491 = vrot.lane.b32.xlu0 %v463, 127
        %v492 = vpop.permute.xlu0 %491
        %v493 = vsel %vm388, %v488, %v490
        %v494 = vsel %vm388, %v490, %v492
        %v498 = vsel %vm379, %v456, %v493
        %v499 = vsel %vm380, %v457, %v494
        %v500 = vsel %vm381, %v454, %v492
        %v501 = vrot.slane %v336, 5
        %v502 = vrot.slane %v340, 5
        %v503 = vrot.slane %v337, 5
        %v510 = vrot.slane %v394, 2
        %v511 = vrot.slane %v395, 2
        %v512 = vrot.slane %v396, 2
        %v519 = vrot.slane %v432, 7
        %v520 = vrot.slane %v433, 7
        %v521 = vrot.slane %v434, 7
        %v525 = vcombine.low %v336, %v336
        %v526 = vcombine.low %v337, %v337
        %527 = vrot.lane.b32.xlu0 %v525, 112
        %v528 = vpop.permute.xlu0 %527
        %529 = vrot.lane.b32.xlu0 %v526, 112
        %v530 = vpop.permute.xlu0 %529
        %v531 = vsel %vm403, %v528, %v398
        %v532 = vsel %vm403, %v398, %v530
        %v539 = vrot.slane %v446, 1
        %v540 = vrot.slane %v447, 1
        %v541 = vrot.slane %v448, 1
        %v548 = vrot.slane %v484, 6
        %v549 = vrot.slane %v485, 6
        %v550 = vrot.slane %v486, 6
        %v554 = vrot.slane %v336, 3
        %v555 = vrot.slane %v340, 3
        %v556 = vrot.slane %v337, 3
        %557 = vrot.lane.b32.xlu0 %v554, 96
        %v558 = vpop.permute.xlu0 %557
        %559 = vrot.lane.b32.xlu0 %v555, 96
        %v560 = vpop.permute.xlu0 %559
        %561 = vrot.lane.b32.xlu0 %v556, 96
        %v562 = vpop.permute.xlu0 %561
        %v563 = vsel %vm455, %v558, %v560
        %v564 = vsel %vm455, %v560, %v562
        %vm568 = vcmask 1042432
        %v569 = vsel %vm568, %v373, %v501
        %v570 = vsel %vm568, %v374, %v502
        %v571 = vsel %vm568, %v375, %v503
        %vm572 = vcmask 1045504
        %v573 = vsel %vm572, %v569, %v510
        %v574 = vsel %vm572, %v570, %v511
        %v575 = vsel %vm572, %v571, %v512
        %vm576 = vcmask 1040384
        %v577 = vsel %vm576, %v510, %v519
        %v578 = vsel %vm576, %v511, %v520
        %v579 = vsel %vm576, %v512, %v521
        %vm580 = vcmask 1043456
        %v581 = vsel %vm580, %v577, %v531
        %v582 = vsel %vm580, %v578, %v532
        %v583 = vsel %vm580, %v579, %v530
        %vm584 = vcmask 1046528
        %v585 = vsel %vm584, %v581, %v539
        %v586 = vsel %vm584, %v582, %v540
        %v587 = vsel %vm584, %v583, %v541
        %vm588 = vcmask 1041408
        %v589 = vsel %vm588, %v539, %v548
        %v590 = vsel %vm588, %v540, %v549
        %v591 = vsel %vm588, %v541, %v550
        %vm592 = vcmask 1044480
        %v593 = vsel %vm592, %v589, %v563
        %v594 = vsel %vm592, %v590, %v564
        %v595 = vsel %vm592, %v591, %v562
        %v596 = vpack.c.bf16 %v585, %v573
        %v597 = vpack.c.bf16 %v586, %v574
        %v598 = vpack.c.bf16 %v587, %v575
        %v599 = vpack.c.bf16 %v498, %v593
        %v600 = vpack.c.bf16 %v499, %v594
        %v601 = vpack.c.bf16 %v500, %v595
        %v608 = vunpack.c.l.b16 %v596
        %v609 = vunpack.c.l.b16 %v597
        %v610 = vunpack.c.l.b16 %v598
        %v611 = vunpack.c.h.b16 %v596
        %v612 = vunpack.c.h.b16 %v597
        %v613 = vunpack.c.h.b16 %v598
        %v614 = vunpack.c.l.b16 %v599
        %v615 = vunpack.c.l.b16 %v600
        %v616 = vunpack.c.l.b16 %v601
        %v617 = vunpack.c.h.b16 %v599
        %v618 = vunpack.c.h.b16 %v600
        %v619 = vunpack.c.h.b16 %v601
        %v620 = vpack.c.b16 %v609, %v608
        %v621 = vpack.c.b16 %v610, %v610
        %v622 = vpack.c.b16 %v612, %v611
        %v623 = vpack.c.b16 %v613, %v613
        %v624 = vpack.c.b16 %v615, %v614
        %v625 = vpack.c.b16 %v616, %v616
        %v626 = vpack.c.b16 %v618, %v617
        %v627 = vpack.c.b16 %v619, %v619
        %636 = vst [vmem:[#allocation2] sm:$0xff] %v620
        %vm637 = vcmask 257024
        %638 = vst.msk [vmem:[#allocation2 + $0x8] sm:$0xf] %vm637, %v621
        %639 = vst [vmem:[#allocation2 + $0xc] sm:$0xff] %v622
        %640 = vst.msk [vmem:[#allocation2 + $0x14] sm:$0xf] %vm637, %v623
        %641 = vst [vmem:[#allocation2 + $0x18] sm:$0xff] %v624
        %642 = vst.msk [vmem:[#allocation2 + $0x20] sm:$0xf] %vm637, %v625
        %vm643 = vcmask 1041408
        %vm644 = vsmask.f32 1280
        %vm645 = vmand %vm643, %vm644
        %vm646 = vcmask 1045508
        %vm647 = vsmask.f32 5376
        %vm648 = vmand %vm646, %vm647
        %vm649 = vmor %vm648, %vm645
        %v650 = vld [vmem:[#allocation2 + $0x24] sm:$0x33]
        %v651 = vsel %vm649, %v626, %v650
        %652 = vst [vmem:[#allocation2 + $0x24] sm:$0x33] %v651
        %vm653 = vcmask 254976
        %vm654 = vmand %vm653, %vm644
        %v655 = vld [vmem:[#allocation2 + $0x2c] sm:$0x3]
        %v656 = vsel %vm654, %v627, %v655
        %657 = vst [vmem:[#allocation2 + $0x2c] sm:$0x3] %v656
        %v658 = vld [vmem:[%s3] sm:$0xf]
        %v659 = vld [vmem:[#allocation2] sm:$0xff]
        %v660 = vld [vmem:[#allocation2 + $0x8] sm:$0xf]
        %v661 = vld [vmem:[#allocation2 + $0xc] sm:$0xff]
        %v662 = vld [vmem:[#allocation2 + $0x14] sm:$0xf]
        %v663 = vld [vmem:[#allocation2 + $0x18] sm:$0xff]
        %v664 = vld [vmem:[#allocation2 + $0x20] sm:$0xf]
        %v665 = vld [vmem:[#allocation2 + $0x24] sm:$0x33]
        %v666 = vld [vmem:[#allocation2 + $0x2c] sm:$0x3]
        %v675 = vunpack.c.l.b16 %v659
        %v676 = vunpack.c.h.b16 %v659
        %v677 = vunpack.c.l.b16 %v660
        %v678 = vunpack.c.l.b16 %v661
        %v679 = vunpack.c.h.b16 %v661
        %v680 = vunpack.c.l.b16 %v662
        %v681 = vunpack.c.l.b16 %v663
        %v682 = vunpack.c.h.b16 %v663
        %v683 = vunpack.c.l.b16 %v664
        %v684 = vunpack.c.l.b16 %v665
        %v685 = vunpack.c.h.b16 %v665
        %v686 = vunpack.c.l.b16 %v666
        %v687 = vpack.c.b16 %v678, %v675
        %v688 = vpack.c.b16 %v679, %v676
        %v689 = vpack.c.b16 %v680, %v677
        %v690 = vpack.c.b16 %v684, %v681
        %v691 = vpack.c.b16 %v685, %v682
        %v692 = vpack.c.b16 %v686, %v683
        %vm696 = vcmask 220160
        %v698 = vsel %vm696, %v658, 0
        %v700 = vsel %vm592, 4294967295, 65535
        %v701 = vsel %vm572, %v700, 0
        %v703 = vand.u32 %v690, %v701
        %v706 = vand.u32 %v691, %v701
        %v709 = vand.u32 %v692, %v701
        %711 = vmatprep.subr.bf16.mxu0 0
        %712 = vmatpush1.bf16.msra.mxu0 0
        %713 = vmatprep.subr.bf16.mxu0 0
        %714 = vmatpush1.bf16.msra.mxu0 0
        %715 = vmatprep.subr.bf16.mxu0 0
        %716 = vmatpush1.bf16.msra.mxu0 0
        %717 = vmatprep.subr.bf16.mxu0 0
        %718 = vmatpush1.bf16.msra.mxu0 0
        %719 = vmatprep.subr.bf16.mxu0 0
        %720 = vmatpush1.bf16.msra.mxu0 0
        %721 = vmatprep.subr.bf16.mxu0 0
        %722 = vmatpush1.bf16.msra.mxu0 0
        %723 = vmatprep.subr.bf16.mxu0 %v706
        %724 = vmatpush1.bf16.msra.mxu0 %v703
        %725 = vmatprep.subr.bf16.mxu0 %v688
        %726 = vmatpush1.bf16.msra.mxu0 %v687
        %727 = vmatprep.subr.bf16.mxu0 0
        %728 = vmatpush2.bf16.msra.mxu0 0
        %729 = vmatprep.subr.bf16.mxu0 0
        %730 = vmatpush2.bf16.msra.mxu0 0
        %731 = vmatprep.subr.bf16.mxu0 0
        %732 = vmatpush2.bf16.msra.mxu0 0
        %733 = vmatprep.subr.bf16.mxu0 0
        %734 = vmatpush2.bf16.msra.mxu0 0
        %735 = vmatprep.subr.bf16.mxu0 0
        %736 = vmatpush2.bf16.msra.mxu0 0
        %737 = vmatprep.subr.bf16.mxu0 0
        %738 = vmatpush2.bf16.msra.mxu0 0
        %739 = vmatprep.subr.bf16.mxu0 0
        %740 = vmatpush2.bf16.msra.mxu0 0
        %741 = vmatprep.subr.bf16.mxu0 0
        %742 = vmatpush2.bf16.msra.mxu0 0
        %743 = vmatprep.mubr.bf16.mxu0 0
        %744 = vmatmul.mubr.bf16.gmra.mxu0 %v698
        %v745 = vpop.f32.mrf.mxu0
        %v746 = vadd.f32 0.0, %v745
        %v747 = vpop.f32.mrf.mxu0
        %v748 = vadd.f32 0.0, %v747
        %v749 = vpop.f32.mrf.mxu0
        %v750 = vpop.f32.mrf.mxu0
        %751 = vdwg.mxu0
        %752 = vmatprep.subr.bf16.mxu0 0
        %753 = vmatpush1.bf16.msra.mxu0 0
        %754 = vmatprep.subr.bf16.mxu0 0
        %755 = vmatpush1.bf16.msra.mxu0 0
        %756 = vmatprep.subr.bf16.mxu0 0
        %757 = vmatpush1.bf16.msra.mxu0 0
        %758 = vmatprep.subr.bf16.mxu0 0
        %759 = vmatpush1.bf16.msra.mxu0 0
        %760 = vmatprep.subr.bf16.mxu0 0
        %761 = vmatpush1.bf16.msra.mxu0 0
        %762 = vmatprep.subr.bf16.mxu0 0
        %763 = vmatpush1.bf16.msra.mxu0 0
        %764 = vmatprep.subr.bf16.mxu0 0
        %765 = vmatpush1.bf16.msra.mxu0 %v709
        %766 = vmatprep.subr.bf16.mxu0 0
        %767 = vmatpush1.bf16.msra.mxu0 %v689
        %768 = vmatprep.subr.bf16.mxu0 0
        %769 = vmatpush2.bf16.msra.mxu0 0
        %770 = vmatprep.subr.bf16.mxu0 0
        %771 = vmatpush2.bf16.msra.mxu0 0
        %772 = vmatprep.subr.bf16.mxu0 0
        %773 = vmatpush2.bf16.msra.mxu0 0
        %774 = vmatprep.subr.bf16.mxu0 0
        %775 = vmatpush2.bf16.msra.mxu0 0
        %776 = vmatprep.subr.bf16.mxu0 0
        %777 = vmatpush2.bf16.msra.mxu0 0
        %778 = vmatprep.subr.bf16.mxu0 0
        %779 = vmatpush2.bf16.msra.mxu0 0
        %780 = vmatprep.subr.bf16.mxu0 0
        %781 = vmatpush2.bf16.msra.mxu0 0
        %782 = vmatprep.subr.bf16.mxu0 0
        %783 = vmatpush2.bf16.msra.mxu0 0
        %784 = vmatprep.mubr.bf16.mxu0 0
        %785 = vmatmul.mubr.bf16.gmra.mxu0 %v698
        %v786 = vpop.f32.mrf.mxu0
        %v787 = vadd.f32 0.0, %v786
        %v788 = vpop.f32.mrf.mxu0
        %v789 = vpop.f32.mrf.mxu0
        %v790 = vpop.f32.mrf.mxu0
        %791 = vdwg.mxu0
        %s792 = sld [smem:[#allocation4]]
        %vm793 = vcmp.ge.f32.partialorder %v746, 0.0
        %vm794 = vcmp.ge.f32.partialorder %v748, 0.0
        %vm795 = vcmp.ge.f32.partialorder %v787, 0.0
        %v796 = vstv %s792
        %v797 = vmul.f32 %v796, %v746
        %v798 = vmul.f32 %v796, %v748
        %v799 = vmul.f32 %v796, %v787
        %v800 = vsel %vm793, %v746, %v797
        %v801 = vsel %vm794, %v748, %v798
        %v802 = vsel %vm795, %v787, %v799
        %803 = vst [vmem:[#allocation3] sm:$0xff] %v800
        %804 = vst [vmem:[#allocation3 + $0x8] sm:$0xff] %v801
        %vm805 = vcmask 261120
        %806 = vst.msk [vmem:[#allocation3 + $0x10] sm:$0xff] %vm805, %v802
        %p807 = scmp.eq.s32.totalorder %s25, 0
        // Predicated region
        $region41: #{tpu_custom_call.1} parent=39 // pred_check
          %p808 = pneg %p807
        $region42: #{tpu_custom_call.1} parent=39 // pred_check_branch
          %810 = sbr.rel (%p808) target = $region44
        $region43: #{tpu_custom_call.1} parent=39 // pred_region
          %v811 = vld [vmem:[#allocation3] sm:$0xff]
          %813 = vrot.lane.b32.xlu0 %v811, 112
          %v814 = vpop.permute.xlu0 %813
          %vm816 = vcmask 130048
          %817 = vst.msk [vmem:[#allocation3] sm:$0xff] %vm816, %v814
          %v818 = vld [vmem:[#allocation3 + $0x10] sm:$0xff]
          %820 = vrot.lane.b32.xlu0 %v818, 16
          %v821 = vpop.permute.xlu0 %820
          %vm823 = vcmask 261248
          %824 = vst.msk [vmem:[#allocation3 + $0x10] sm:$0xff] %vm823, %v821
        $region44: #{tpu_custom_call.1} parent=39 // pred_fallthru
          _
        %v825 = vld [vmem:[#allocation3] sm:$0xff]
        %v826 = vld [vmem:[#allocation3 + $0x8] sm:$0xff]
        %827 = vrot.lane.b32.xlu0 %v825, 1
        %v828 = vpop.permute.xlu0 %827
        %829 = vrot.lane.b32.xlu0 %v826, 1
        %v830 = vpop.permute.xlu0 %829
        %vm831 = vcmp.lt.s32.totalorder %v291, 1
        %v832 = vsel %vm831, %v828, %v830
        %v833 = vsel %vm831, %v830, %v828
        %v834 = vsel %vm355, %v825, %v833
        %v835 = vsel %vm356, %v826, %v832
        %836 = vrot.lane.b32.xlu0 %v825, 127
        %v837 = vpop.permute.xlu0 %836
        %838 = vrot.lane.b32.xlu0 %v826, 127
        %v839 = vpop.permute.xlu0 %838
        %vm840 = vcmp.lt.s32.totalorder %v291, 127
        %v841 = vsel %vm840, %v837, %v839
        %v842 = vsel %vm840, %v839, %v837
        %v843 = vsel %vm379, %v825, %v841
        %v844 = vsel %vm380, %v826, %v842
        %v845 = vpack.c.bf16 %v834, %v834
        %v846 = vpack.c.bf16 %v835, %v835
        %v849 = vunpack.c.l.b16 %v845
        %v850 = vunpack.c.l.b16 %v846
        %v851 = vpack.c.b16 %v850, %v849
        %853 = vst [vmem:[#allocation2] sm:$0xff] %v851
        %v854 = vpack.c.bf16 %v825, %v825
        %v855 = vpack.c.bf16 %v826, %v826
        %v858 = vunpack.c.l.b16 %v854
        %v859 = vunpack.c.l.b16 %v855
        %v860 = vpack.c.b16 %v859, %v858
        %862 = vst [vmem:[#allocation2 + $0xc] sm:$0xff] %v860
        %v863 = vpack.c.bf16 %v843, %v843
        %v864 = vpack.c.bf16 %v844, %v844
        %v867 = vunpack.c.l.b16 %v863
        %v868 = vunpack.c.l.b16 %v864
        %v869 = vpack.c.b16 %v868, %v867
        %871 = vst [vmem:[#allocation2 + $0x18] sm:$0xff] %v869
        %v872 = vld [vmem:[#allocation3] sm:$0xff]
        %v873 = vld [vmem:[#allocation3 + $0x8] sm:$0xff]
        %v874 = vld [vmem:[#allocation3 + $0x10] sm:$0xff]
        %878 = vrot.lane.b32.xlu0 %v872, 112
        %v879 = vpop.permute.xlu0 %878
        %880 = vrot.lane.b32.xlu0 %v873, 112
        %v881 = vpop.permute.xlu0 %880
        %882 = vrot.lane.b32.xlu0 %v874, 112
        %v883 = vpop.permute.xlu0 %882
        %v884 = vsel %vm403, %v879, %v881
        %v885 = vsel %vm403, %v881, %v883
        %888 = vrot.lane.b32.xlu0 %v884, 1
        %v889 = vpop.permute.xlu0 %888
        %890 = vrot.lane.b32.xlu0 %v885, 1
        %v891 = vpop.permute.xlu0 %890
        %v892 = vsel %vm831, %v889, %v891
        %v893 = vsel %vm831, %v891, %v889
        %v894 = vsel %vm355, %v884, %v893
        %v895 = vsel %vm356, %v885, %v892
        %896 = vrot.lane.b32.xlu0 %v884, 127
        %v897 = vpop.permute.xlu0 %896
        %898 = vrot.lane.b32.xlu0 %v885, 127
        %v899 = vpop.permute.xlu0 %898
        %v900 = vsel %vm840, %v897, %v899
        %v901 = vsel %vm840, %v899, %v897
        %v902 = vsel %vm379, %v884, %v900
        %v903 = vsel %vm380, %v885, %v901
        %v904 = vpack.c.bf16 %v894, %v894
        %v905 = vpack.c.bf16 %v895, %v895
        %v908 = vunpack.c.l.b16 %v904
        %v909 = vunpack.c.l.b16 %v905
        %v910 = vpack.c.b16 %v909, %v908
        %912 = vst [vmem:[#allocation2 + $0x24] sm:$0xff] %v910
        %v913 = vpack.c.bf16 %v872, %v872
        %v914 = vpack.c.bf16 %v873, %v873
        %v915 = vpack.c.bf16 %v874, %v874
        %v919 = vunpack.c.l.b16 %v913
        %v920 = vunpack.c.l.b16 %v914
        %v921 = vunpack.c.l.b16 %v915
        %v922 = vpack.c.b16 %v920, %v919
        %v923 = vpack.c.b16 %v921, %v921
        %924 = vrot.lane.b32.xlu0 %v922, 112
        %v925 = vpop.permute.xlu0 %924
        %926 = vrot.lane.b32.xlu0 %v923, 112
        %v927 = vpop.permute.xlu0 %926
        %v928 = vrot.slane %v925, 4
        %v929 = vrot.slane %v927, 4
        %vm930 = vcmask 1043456
        %v931 = vsel %vm930, %v928, %v929
        %vm932 = vcmask 916480
        %v933 = vsel %vm932, %v925, %v931
        %935 = vst [vmem:[#allocation2 + $0x30] sm:$0xff] %v933
        %v936 = vpack.c.bf16 %v902, %v902
        %v937 = vpack.c.bf16 %v903, %v903
        %v940 = vunpack.c.l.b16 %v936
        %v941 = vunpack.c.l.b16 %v937
        %v942 = vpack.c.b16 %v941, %v940
        %944 = vst [vmem:[#allocation2 + $0x3c] sm:$0xff] %v942
        %v945 = vld [vmem:[#allocation3] sm:$0xff]
        %v946 = vld [vmem:[#allocation3 + $0x8] sm:$0xff]
        %v947 = vld [vmem:[#allocation3 + $0x10] sm:$0xff]
        %951 = vrot.lane.b32.xlu0 %v945, 96
        %v952 = vpop.permute.xlu0 %951
        %953 = vrot.lane.b32.xlu0 %v946, 96
        %v954 = vpop.permute.xlu0 %953
        %955 = vrot.lane.b32.xlu0 %v947, 96
        %v956 = vpop.permute.xlu0 %955
        %v957 = vsel %vm455, %v952, %v954
        %v958 = vsel %vm455, %v954, %v956
        %961 = vrot.lane.b32.xlu0 %v957, 1
        %v962 = vpop.permute.xlu0 %961
        %963 = vrot.lane.b32.xlu0 %v958, 1
        %v964 = vpop.permute.xlu0 %963
        %v965 = vsel %vm831, %v962, %v964
        %v966 = vsel %vm831, %v964, %v962
        %v967 = vsel %vm355, %v957, %v966
        %v968 = vsel %vm356, %v958, %v965
        %969 = vrot.lane.b32.xlu0 %v957, 127
        %v970 = vpop.permute.xlu0 %969
        %971 = vrot.lane.b32.xlu0 %v958, 127
        %v972 = vpop.permute.xlu0 %971
        %v973 = vsel %vm840, %v970, %v972
        %v974 = vsel %vm840, %v972, %v970
        %v975 = vsel %vm379, %v957, %v973
        %v976 = vsel %vm380, %v958, %v974
        %v977 = vpack.c.bf16 %v967, %v967
        %v978 = vpack.c.bf16 %v968, %v968
        %v981 = vunpack.c.l.b16 %v977
        %v982 = vunpack.c.l.b16 %v978
        %v983 = vpack.c.b16 %v982, %v981
        %985 = vst [vmem:[#allocation2 + $0x48] sm:$0xff] %v983
        %v986 = vpack.c.bf16 %v945, %v945
        %v987 = vpack.c.bf16 %v946, %v946
        %v988 = vpack.c.bf16 %v947, %v947
        %v992 = vunpack.c.l.b16 %v986
        %v993 = vunpack.c.l.b16 %v987
        %v994 = vunpack.c.l.b16 %v988
        %v995 = vpack.c.b16 %v993, %v992
        %v996 = vpack.c.b16 %v994, %v994
        %997 = vrot.lane.b32.xlu0 %v995, 96
        %v998 = vpop.permute.xlu0 %997
        %999 = vrot.lane.b32.xlu0 %v996, 96
        %v1000 = vpop.permute.xlu0 %999
        %v1001 = vrot.slane %v998, 4
        %v1002 = vrot.slane %v1000, 4
        %v1003 = vsel %vm930, %v1001, %v1002
        %vm1004 = vcmask 785408
        %v1005 = vsel %vm1004, %v998, %v1003
        %1007 = vst [vmem:[#allocation2 + $0x54] sm:$0xff] %v1005
        %v1008 = vpack.c.bf16 %v975, %v975
        %v1009 = vpack.c.bf16 %v976, %v976
        %v1012 = vunpack.c.l.b16 %v1008
        %v1013 = vunpack.c.l.b16 %v1009
        %v1014 = vpack.c.b16 %v1013, %v1012
        %1016 = vst [vmem:[#allocation2 + $0x60] sm:$0xff] %v1014
        %v1017 = vld [vmem:[%s4] sm:$0xf]
        %v1018 = vld [vmem:[#allocation2] sm:$0xff]
        %v1019 = vld [vmem:[#allocation2 + $0xc] sm:$0xff]
        %v1020 = vld [vmem:[#allocation2 + $0x18] sm:$0xff]
        %v1021 = vld [vmem:[#allocation2 + $0x24] sm:$0xff]
        %v1022 = vld [vmem:[#allocation2 + $0x30] sm:$0xff]
        %v1023 = vld [vmem:[#allocation2 + $0x3c] sm:$0xff]
        %v1024 = vld [vmem:[#allocation2 + $0x48] sm:$0xff]
        %v1025 = vld [vmem:[#allocation2 + $0x54] sm:$0xff]
        %v1026 = vld [vmem:[#allocation2 + $0x60] sm:$0xff]
        %v1036 = vunpack.c.l.b16 %v1018
        %v1037 = vunpack.c.h.b16 %v1018
        %v1038 = vunpack.c.l.b16 %v1019
        %v1039 = vunpack.c.h.b16 %v1019
        %v1040 = vunpack.c.l.b16 %v1020
        %v1041 = vunpack.c.h.b16 %v1020
        %v1042 = vunpack.c.l.b16 %v1021
        %v1043 = vunpack.c.h.b16 %v1021
        %v1044 = vunpack.c.l.b16 %v1022
        %v1045 = vunpack.c.h.b16 %v1022
        %v1046 = vunpack.c.l.b16 %v1023
        %v1047 = vunpack.c.h.b16 %v1023
        %v1048 = vunpack.c.l.b16 %v1024
        %v1049 = vunpack.c.h.b16 %v1024
        %v1050 = vunpack.c.l.b16 %v1025
        %v1051 = vunpack.c.h.b16 %v1025
        %v1052 = vunpack.c.l.b16 %v1026
        %v1053 = vunpack.c.h.b16 %v1026
        %v1054 = vpack.c.b16 %v1038, %v1036
        %v1055 = vpack.c.b16 %v1039, %v1037
        %v1056 = vpack.c.b16 %v1042, %v1040
        %v1057 = vpack.c.b16 %v1043, %v1041
        %v1058 = vpack.c.b16 %v1046, %v1044
        %v1059 = vpack.c.b16 %v1047, %v1045
        %v1060 = vpack.c.b16 %v1050, %v1048
        %v1061 = vpack.c.b16 %v1051, %v1049
        %v1062 = vpack.c.b16 %v1052, %v1052
        %v1063 = vpack.c.b16 %v1053, %v1053
        %vm1072 = vcmask 588800
        %v1074 = vsel %vm1072, %v1017, 0
        %v1077 = vsel %vm580, %v1062, 0
        %v1080 = vsel %vm580, %v1063, 0
        %1082 = vmatprep.subr.bf16.mxu0 0
        %1083 = vmatpush1.bf16.msra.mxu0 0
        %1084 = vmatprep.subr.bf16.mxu0 0
        %1085 = vmatpush1.bf16.msra.mxu0 0
        %1086 = vmatprep.subr.bf16.mxu0 0
        %1087 = vmatpush1.bf16.msra.mxu0 0
        %1088 = vmatprep.subr.bf16.mxu0 %v1080
        %1089 = vmatpush1.bf16.msra.mxu0 %v1077
        %1090 = vmatprep.subr.bf16.mxu0 %v1061
        %1091 = vmatpush1.bf16.msra.mxu0 %v1060
        %1092 = vmatprep.subr.bf16.mxu0 %v1059
        %1093 = vmatpush1.bf16.msra.mxu0 %v1058
        %1094 = vmatprep.subr.bf16.mxu0 %v1057
        %1095 = vmatpush1.bf16.msra.mxu0 %v1056
        %1096 = vmatprep.subr.bf16.mxu0 %v1055
        %1097 = vmatpush1.bf16.msra.mxu0 %v1054
        %1098 = vmatprep.subr.bf16.mxu0 0
        %1099 = vmatpush2.bf16.msra.mxu0 0
        %1100 = vmatprep.subr.bf16.mxu0 0
        %1101 = vmatpush2.bf16.msra.mxu0 0
        %1102 = vmatprep.subr.bf16.mxu0 0
        %1103 = vmatpush2.bf16.msra.mxu0 0
        %1104 = vmatprep.subr.bf16.mxu0 0
        %1105 = vmatpush2.bf16.msra.mxu0 0
        %1106 = vmatprep.subr.bf16.mxu0 0
        %1107 = vmatpush2.bf16.msra.mxu0 0
        %1108 = vmatprep.subr.bf16.mxu0 0
        %1109 = vmatpush2.bf16.msra.mxu0 0
        %1110 = vmatprep.subr.bf16.mxu0 0
        %1111 = vmatpush2.bf16.msra.mxu0 0
        %1112 = vmatprep.subr.bf16.mxu0 0
        %1113 = vmatpush2.bf16.msra.mxu0 0
        %1114 = vmatprep.mubr.bf16.mxu0 0
        %1115 = vmatmul.mubr.bf16.gmra.mxu0 %v1074
        %v1116 = vpop.f32.mrf.mxu0
        %v1117 = vadd.f32 0.0, %v1116
        %v1118 = vpop.f32.mrf.mxu0
        %v1119 = vadd.f32 0.0, %v1118
        %v1120 = vpop.f32.mrf.mxu0
        %v1121 = vpop.f32.mrf.mxu0
        %1122 = vdwg.mxu0
        %v1123 = vsub.f32 0.0, %v1117
        %v1124 = vsub.f32 0.0, %v1119
        %v1125 = vmin.f32 %v1123, 80.0
        %v1126 = vmin.f32 %v1124, 80.0
        %v1127 = vmul.f32 %v1125, 1.442695
        %v1128 = vpow.pop %v1127
        %v1129 = vmul.f32 %v1126, 1.442695
        %v1130 = vpow.pop %v1129
        %v1131 = vadd.f32 %v1128, 1.0
        %v1132 = vadd.f32 %v1130, 1.0
        %v1133 = vrcp.pop %v1131
        %v1134 = vrcp.pop %v1132
        %v1135 = vld [vmem:[%s286] sm:$0xff]
        %v1136 = vld [vmem:[%s286 + $0x8] sm:$0xff]
        %v1137 = vadd.f32 %v1133, 1.0
        %v1138 = vadd.f32 %v1134, 1.0
        %v1139 = vmul.f32 %v1135, %v1137
        %v1140 = vmul.f32 %v1136, %v1138
        %1141 = vst [vmem:[%s268] sm:$0xff] %v1139
        %1142 = vst [vmem:[%s268 + $0x8] sm:$0xff] %v1140
        %s1143 = sand.u32 %s161, 1
        %s1144 = scalar_lea.sflag [#allocation6], %s1143
        %s1145 = sand.u32 %s161, 1
        %s1146 = smul.addr %s1145, 16
        %s1147 = scalar_lea.vmem [#allocation5], %s1146
        // Predicated region
        $region45: #{tpu_custom_call.1} parent=39 // pred_check
          %p1148 = pneg %p171
        $region46: #{tpu_custom_call.1} parent=39 // pred_check_branch
          %1150 = sbr.rel (%p1148) target = $region48
        $region47: #{tpu_custom_call.1} parent=39 // pred_region
          %s1151 = smul.u32 2, %s25
          %s1153 = ssub.s32 256, 256
          %1154 = vsyncadd %s1144, %s1153
          %s1155 = smul.addr %s24, 2
          %s1156 = sadd.s32 %s1151, %s1155
          %s1157 = smul.addr %s1156, 128
          %s1158 = scalar_lea.hbm %s5, %s1157
          %s1160 = sshll.u32 %s1147, 4
          %s1161 = int_to_ptr.vmem [resolvable:$true] %s1160
          %1163 = dma.vmem_to_hbm [thread:$0]  %s1161, 256, %s1158, %s1144
        $region48: #{tpu_custom_call.1} parent=39 // pred_fallthru
          _
      $region40: #{tpu_custom_call.1} parent=5 // pred_fallthru
        _
      %p1164 = scmp.le.s32.totalorder 2, %s15
      // Predicated region
      $region49: #{tpu_custom_call.1} parent=5 // pred_check
        %p1165 = pneg %p1164
      $region50: #{tpu_custom_call.1} parent=5 // pred_check_branch
        %1167 = sbr.rel (%p1165) target = $region52
      $region51: #{tpu_custom_call.1} parent=5 // pred_region
        %s1168 = ssub.s32 %s15, 2
        // Predicated region
        $region53: #{tpu_custom_call.1} parent=51 // pred_check
          %p1169 = pneg %p177
        $region54: #{tpu_custom_call.1} parent=51 // pred_check_branch
          %1171 = sbr.rel (%p1169) target = $region56
        $region55: #{tpu_custom_call.1} parent=51 // pred_region
          %s1172 = sand.u32 %s162, 1
          %s1173 = scalar_lea.sflag [#allocation6], %s1172
          %s1174 = sand.u32 %s162, 1
          %s1175 = smul.addr %s1174, 16
          %s1176 = scalar_lea.vmem [#allocation5], %s1175
          %1177 = dma.done %s1173, 256
        $region56: #{tpu_custom_call.1} parent=51 // pred_fallthru
          _
      $region52: #{tpu_custom_call.1} parent=5 // pred_fallthru
        _
    $region6: #{tpu_custom_call.1} parent=1 // loop_footer
      %s19 = sadd.s32 1, %s15
    $region7: #{tpu_custom_call.1} parent=1 // loop_footer_branch
      %14 = sbr.rel target = $region3
    $region8: #{tpu_custom_call.1} parent=1 // loop_exit
      _
    %1178 = vsyncpa [#allocation6], 1
    %s1179 = scalar_lea.sflag [#allocation6], 1
    %1180 = vsyncpa %s1179, 1

</llo_original>
